<compile_context>
chip_gen: v6e
topology: v6e:2x2x1
jax: 0.10.0
libtpu: 0.0.40
codegen_flags: <defaults>
</compile_context>

<pallas_src>
import functools

import jax
import jax.numpy as jnp
from jax.experimental import pallas as pl
from jax.experimental.pallas import tpu as pltpu


def _phys_vmem_bytes():
    """Best-effort physical VMEM query; conservative (v7x-sized) fallback."""
    try:
        info = pltpu.get_tpu_info()
        for attr in ("vmem_capacity_bytes", "vmem_size_bytes", "vmem_bytes"):
            v = getattr(info, attr, None)
            if v:
                return int(v)
    except Exception:
        pass
    return 64 * 1024 * 1024


def init_mlp_weights(gate_w, up_w, down_w, *, block_n=512, dtype=jnp.bfloat16):
    """One-time model-init transform (outside jit).

    gate_w, up_w : [inter, H]  (PyTorch nn.Linear layout, weight = [out, in])
    down_w       : [H, inter]
    Returns:
      gate_up_tiled : [nc, H, 2*block_n]  chunk k = [gate chunk k | up chunk k],
                      each chunk fully contiguous in HBM.
      down_t        : [inter_pad, H]      pre-transposed down_proj weight.
    `inter` is zero-padded up to a multiple of block_n (padded columns produce
    silu(0)*0 = 0 and the padded down rows are 0, so the result is unchanged).
    """
    inter, H = gate_w.shape
    assert up_w.shape == (inter, H) and down_w.shape == (H, inter)
    assert block_n % 128 == 0, "block_n must be a multiple of 128 (lane width)"

    inter_pad = -(-inter // block_n) * block_n
    pad = inter_pad - inter
    g = jnp.pad(gate_w, ((0, pad), (0, 0)))          # [inter_pad, H]
    u = jnp.pad(up_w, ((0, pad), (0, 0)))            # [inter_pad, H]
    d = jnp.pad(down_w, ((0, 0), (0, pad)))          # [H, inter_pad]

    nc = inter_pad // block_n
    g3 = g.T.reshape(H, nc, block_n)
    u3 = u.T.reshape(H, nc, block_n)
    gu = jnp.concatenate([g3, u3], axis=-1)          # [H, nc, 2*block_n]
    gate_up_tiled = jnp.transpose(gu, (1, 0, 2))     # [nc, H, 2*block_n]
    down_t = d.T                                     # [inter_pad, H]
    return gate_up_tiled.astype(dtype), down_t.astype(dtype)


def _mlp_kernel(x_ref, guw_ref, dw_ref, o_ref, acc_ref):
    """Grid = (core split, token tiles, intermediate chunks).

    x_ref  : (tm, H)            token tile (same block for every k)
    guw_ref: (H, 2*block_n)     fused [gate | up] weight chunk (leading dim squeezed)
    dw_ref : (block_n, H)       down_proj weight chunk
    o_ref  : (tm, H)            (partial) output tile, resident across k
    acc_ref: (tm, H) f32        VMEM accumulator
    """
    k = pl.program_id(2)
    bn = guw_ref.shape[-1] // 2

    xv = x_ref[...].astype(guw_ref.dtype)            # bf16 MXU rate even for f32 x
    gu = jnp.dot(xv, guw_ref[...], preferred_element_type=jnp.float32)
    g = gu[:, :bn]
    u = gu[:, bn:]
    h = (g * jax.nn.sigmoid(g)) * u                  # SiLU(gate) * up, in f32
    partial = jnp.dot(h.astype(dw_ref.dtype), dw_ref[...],
                      preferred_element_type=jnp.float32)

    @pl.when(k == 0)
    def _():
        acc_ref[...] = partial

    @pl.when(k > 0)
    def _():
        acc_ref[...] += partial

    @pl.when(k == pl.num_programs(2) - 1)
    def _():
        o_ref[...] = acc_ref[...].astype(o_ref.dtype)


@functools.partial(jax.jit, static_argnames=("tm",))
def mlp_pallas(x, gate_up_tiled, down_t, *, tm=None):
    """x: [..., H]; gate_up_tiled: [nc, H, 2*bn]; down_t: [nc*bn, H] (init_mlp_weights)."""
    H = x.shape[-1]
    x2 = x.reshape(-1, H)
    T = x2.shape[0]

    nc, Hw, two_bn = gate_up_tiled.shape
    bn = two_bn // 2
    inter_pad = nc * bn
    assert Hw == H, "hidden size mismatch between x and fused weights"
    assert down_t.shape == (inter_pad, H), "down_t does not match fused gate_up tiling"
    assert H % 128 == 0, "hidden_size must be a multiple of 128"

    phys_vmem = _phys_vmem_bytes()

    # Token tile: as large as the generation's VMEM allows (less weight
    # re-streaming at prefill, full MXU M); single tile at decode.
    if tm is None:
        target = 512 if phys_vmem >= 96 * 1024 * 1024 else 256
        tm = T if T <= target else target
    tm = min(tm, T)
    assert tm == T or tm % 8 == 0, "token tile must be sublane (8) aligned"

    t_tiles = pl.cdiv(T, tm)
    # Decode: split the intermediate chunks across a leading "parallel" axis so
    # both TensorCores (v7x) stream half the weights each; harmless on 1-TC chips.
    n_split = 2 if (t_tiles == 1 and nc % 2 == 0) else 1
    nk = nc // n_split

    out_dtype = x.dtype
    partial_dtype = jnp.float32 if n_split > 1 else out_dtype

    w_bytes = (gate_up_tiled.size + down_t.size) * jnp.dtype(gate_up_tiled.dtype).itemsize
    cost = pl.CostEstimate(
        flops=6 * T * H * inter_pad,                 # gate_up (4*T*H*I) + down (2*T*H*I)
        transcendentals=T * inter_pad,               # sigmoid
        bytes_accessed=int(w_bytes * t_tiles
                           + x2.size * jnp.dtype(x.dtype).itemsize
                           + T * H * jnp.dtype(out_dtype).itemsize),
    )

    # ~48 MiB on v7x (64 MiB VMEM), ~96 MiB on v5e/v6e (128 MiB VMEM).
    vmem_limit = int(min(phys_vmem * 3 // 4, 128 * 1024 * 1024))

    grid = (n_split, t_tiles, nk)                    # reduction axis last

    out = pl.pallas_call(
        _mlp_kernel,
        out_shape=jax.ShapeDtypeStruct((n_split, T, H), partial_dtype),
        grid_spec=pltpu.PrefetchScalarGridSpec(
            num_scalar_prefetch=0,
            grid=grid,
            in_specs=[
                # token tile
                pl.BlockSpec((tm, H), lambda s, i, k: (i, 0)),
                # contiguous fused [gate|up] chunk (leading chunk dim squeezed)
                pl.BlockSpec((None, H, two_bn), lambda s, i, k: (s * nk + k, 0, 0)),
                # contiguous down_proj row chunk
                pl.BlockSpec((bn, H), lambda s, i, k: (s * nk + k, 0)),
            ],
            out_specs=pl.BlockSpec((None, tm, H), lambda s, i, k: (s, i, 0)),
            scratch_shapes=[pltpu.VMEM((tm, H), jnp.float32)],
        ),
        compiler_params=pltpu.CompilerParams(
            dimension_semantics=("parallel", "parallel", "arbitrary"),
            vmem_limit_bytes=vmem_limit,
        ),
        cost_estimate=cost,
    )(x2, gate_up_tiled, down_t)

    if n_split > 1:
        out = out.sum(axis=0).astype(out_dtype)      # tiny epilogue add (decode only)
    else:
        out = out.reshape(T, H)
    return out.reshape(x.shape)


def mlp_reference(x, gate_w, up_w, down_w):
    g = x @ gate_w.T
    u = x @ up_w.T
    return (jax.nn.silu(g) * u) @ down_w.T


if __name__ == "__main__":
    # Small demo shapes: batch=2, seq=8, hidden=128, inter=384.
    # inter=384 is NOT a multiple of block_n=256 -> exercises the zero-pad path.
    batch, seq = 2, 8
    hidden_size, intermediate_size = 128, 384

    key = jax.random.PRNGKey(0)
    kx, kg, ku, kd = jax.random.split(key, 4)
    x = jax.random.normal(kx, (batch, seq, hidden_size), jnp.float32)
    # nn.Linear weights are [out, in]:
    gate_w = jax.random.normal(kg, (intermediate_size, hidden_size), jnp.float32) * 0.02
    up_w   = jax.random.normal(ku, (intermediate_size, hidden_size), jnp.float32) * 0.02
    down_w = jax.random.normal(kd, (hidden_size, intermediate_size), jnp.float32) * 0.02

    # bf16 reference (weights rounded to bf16, math in f32) — matches kernel numerics.
    ref = mlp_reference(
        x.astype(jnp.bfloat16).astype(jnp.float32).reshape(-1, hidden_size),
        gate_w.astype(jnp.bfloat16).astype(jnp.float32),
        up_w.astype(jnp.bfloat16).astype(jnp.float32),
        down_w.astype(jnp.bfloat16).astype(jnp.float32),
    ).reshape(batch, seq, hidden_size)

    # ---- one-time "model init": fuse + pad + pre-tile + cast to bf16 ----
    # block_n=256 -> inter padded 384 -> 512, nc=2 (exercises the core-split path).
    guw, dwt = init_mlp_weights(gate_w, up_w, down_w, block_n=256)

    # bf16 activation path (production decode/prefill configuration).
    out_bf16 = mlp_pallas(x.astype(jnp.bfloat16), guw, dwt)
    out_bf16 = jax.block_until_ready(out_bf16)
    assert out_bf16.shape == (batch, seq, hidden_size)
    assert out_bf16.dtype == jnp.bfloat16
    assert jnp.allclose(out_bf16.astype(jnp.float32), ref, atol=3e-3, rtol=3e-2), \
        "bf16 kernel mismatch vs reference"

    # f32 activations with bf16 weights (nc=1 config -> single-chunk, no core split).
    guw1, dwt1 = init_mlp_weights(gate_w, up_w, down_w, block_n=512)
    out_f32 = jax.block_until_ready(mlp_pallas(x, guw1, dwt1))
    assert out_f32.shape == (batch, seq, hidden_size)
    assert out_f32.dtype == jnp.float32
    assert jnp.allclose(out_f32, ref, atol=3e-3, rtol=3e-2), \
        "f32-activation kernel mismatch vs reference"

    print("KERNEL_OK")
</pallas_src>

<mosaic_0001>
module attributes {stable_mosaic.version = 11 : i64} {
  func.func @_mlp_kernel(%arg0: i32, %arg1: i32, %arg2: i32, %arg3: memref<16x128xbf16, #tpu.memory_space<vmem>>, %arg4: memref<1x128x512xbf16, #tpu.memory_space<vmem>>, %arg5: memref<256x128xbf16, #tpu.memory_space<vmem>>, %arg6: memref<1x16x128xf32, #tpu.memory_space<vmem>>, %arg7: memref<16x128xf32, #tpu.memory_space<vmem>>) attributes {dimension_semantics = [#tpu.dimension_semantics<parallel>, #tpu.dimension_semantics<parallel>, #tpu.dimension_semantics<arbitrary>], iteration_bounds = array<i64: 2, 1, 1>, scalar_prefetch = 0 : i64, scratch_operands = 1 : i64, tpu.core_type = #tpu.core_type<tc>, window_params = [{transform_indices = @transform_0, window_bounds = array<i64: 16, 128>}, {transform_indices = @transform_1, window_bounds = array<i64: 1, 128, 512>}, {transform_indices = @transform_2, window_bounds = array<i64: 256, 128>}, {transform_indices = @transform_3, window_bounds = array<i64: 1, 16, 128>}]} {
    %c0 = arith.constant 0 : index
    %c0_0 = arith.constant 0 : index
    %0 = vector.load %arg3[%c0, %c0_0] : memref<16x128xbf16, #tpu.memory_space<vmem>>, vector<16x128xbf16>
    %c0_1 = arith.constant 0 : index
    %c0_2 = arith.constant 0 : index
    %c0_3 = arith.constant 0 : index
    %1 = vector.load %arg4[%c0_1, %c0_2, %c0_3] : memref<1x128x512xbf16, #tpu.memory_space<vmem>>, vector<1x128x512xbf16>
    %2 = vector.shape_cast %1 : vector<1x128x512xbf16> to vector<128x512xbf16>
    %cst = arith.constant dense<0.000000e+00> : vector<16x512xf32>
    %3 = tpu.matmul %0, %2, %cst {dimension_numbers = #tpu.dot_dimension_numbers<[1], [0], [0], [1], [0, 0, 1, 1], [], []>} : vector<16x128xbf16>, vector<128x512xbf16>, vector<16x512xf32> -> vector<16x512xf32>
    %4 = vector.extract_strided_slice %3 {offsets = [0, 0], sizes = [16, 256], strides = [1, 1]} : vector<16x512xf32> to vector<16x256xf32>
    %5 = vector.extract_strided_slice %3 {offsets = [0, 256], sizes = [16, 256], strides = [1, 1]} : vector<16x512xf32> to vector<16x256xf32>
    %6 = arith.negf %4 : vector<16x256xf32>
    %7 = math.exp %6 : vector<16x256xf32>
    %cst_4 = arith.constant 1.000000e+00 : f32
    %8 = vector.broadcast %cst_4 : f32 to vector<16x256xf32>
    %9 = arith.addf %8, %7 : vector<16x256xf32>
    %10 = arith.divf %8, %9 : vector<16x256xf32>
    %11 = arith.mulf %4, %10 : vector<16x256xf32>
    %12 = arith.mulf %11, %5 : vector<16x256xf32>
    %13 = arith.truncf %12 : vector<16x256xf32> to vector<16x256xbf16>
    %c0_5 = arith.constant 0 : index
    %c0_6 = arith.constant 0 : index
    %14 = vector.load %arg5[%c0_5, %c0_6] : memref<256x128xbf16, #tpu.memory_space<vmem>>, vector<256x128xbf16>
    %cst_7 = arith.constant dense<0.000000e+00> : vector<16x128xf32>
    %15 = tpu.matmul %13, %14, %cst_7 {dimension_numbers = #tpu.dot_dimension_numbers<[1], [0], [0], [1], [0, 0, 1, 1], [], []>} : vector<16x256xbf16>, vector<256x128xbf16>, vector<16x128xf32> -> vector<16x128xf32>
    %c0_i32 = arith.constant 0 : i32
    %16 = arith.cmpi eq, %arg2, %c0_i32 : i32
    %17 = arith.extui %16 : i1 to i32
    %c0_i32_8 = arith.constant 0 : i32
    %18 = arith.cmpi ne, %17, %c0_i32_8 : i32
    scf.if %18 {
      %c0_13 = arith.constant 0 : index
      %c0_14 = arith.constant 0 : index
      %25 = vector.load %arg7[%c0_13, %c0_14] : memref<16x128xf32, #tpu.memory_space<vmem>>, vector<16x128xf32>
      tpu.vector_store %arg7[%c0_13, %c0_14], %15 {strides = array<i32>} : memref<16x128xf32, #tpu.memory_space<vmem>>, vector<16x128xf32>,
    } else {
    }
    %c0_i32_9 = arith.constant 0 : i32
    %19 = arith.cmpi sgt, %arg2, %c0_i32_9 : i32
    %20 = arith.extui %19 : i1 to i32
    %c0_i32_10 = arith.constant 0 : i32
    %21 = arith.cmpi ne, %20, %c0_i32_10 : i32
    scf.if %21 {
      %c0_13 = arith.constant 0 : index
      %c0_14 = arith.constant 0 : index
      %25 = vector.load %arg7[%c0_13, %c0_14] : memref<16x128xf32, #tpu.memory_space<vmem>>, vector<16x128xf32>
      %26 = arith.addf %25, %15 : vector<16x128xf32>
      %c0_15 = arith.constant 0 : index
      %c0_16 = arith.constant 0 : index
      %27 = vector.load %arg7[%c0_15, %c0_16] : memref<16x128xf32, #tpu.memory_space<vmem>>, vector<16x128xf32>
      tpu.vector_store %arg7[%c0_15, %c0_16], %26 {strides = array<i32>} : memref<16x128xf32, #tpu.memory_space<vmem>>, vector<16x128xf32>,
    } else {
    }
    %c0_i32_11 = arith.constant 0 : i32
    %22 = arith.cmpi eq, %arg2, %c0_i32_11 : i32
    %23 = arith.extui %22 : i1 to i32
    %c0_i32_12 = arith.constant 0 : i32
    %24 = arith.cmpi ne, %23, %c0_i32_12 : i32
    scf.if %24 {
      %c0_13 = arith.constant 0 : index
      %c0_14 = arith.constant 0 : index
      %25 = vector.load %arg7[%c0_13, %c0_14] : memref<16x128xf32, #tpu.memory_space<vmem>>, vector<16x128xf32>
      %c0_15 = arith.constant 0 : index
      %c0_16 = arith.constant 0 : index
      %c0_17 = arith.constant 0 : index
      %26 = vector.load %arg6[%c0_15, %c0_16, %c0_17] : memref<1x16x128xf32, #tpu.memory_space<vmem>>, vector<1x16x128xf32>
      %27 = vector.shape_cast %26 : vector<1x16x128xf32> to vector<16x128xf32>
      %28 = vector.shape_cast %25 : vector<16x128xf32> to vector<1x16x128xf32>
      tpu.vector_store %arg6[%c0_15, %c0_16, %c0_17], %28 {strides = array<i32>} : memref<1x16x128xf32, #tpu.memory_space<vmem>>, vector<1x16x128xf32>,
    } else {
    }
    return
  }
  func.func @transform_0(%arg0: i32, %arg1: i32, %arg2: i32) -> (i32, i32) {
    %c0_i32 = arith.constant 0 : i32
    %c0_i32_0 = arith.constant 0 : i32
    return %arg1, %c0_i32 : i32, i32
  }
  func.func @transform_1(%arg0: i32, %arg1: i32, %arg2: i32) -> (i32, i32, i32) {
    %c1_i32 = arith.constant 1 : i32
    %0 = arith.muli %arg0, %c1_i32 : i32
    %1 = arith.addi %0, %arg2 : i32
    %c0_i32 = arith.constant 0 : i32
    %c0_i32_0 = arith.constant 0 : i32
    %c0_i32_1 = arith.constant 0 : i32
    return %1, %c0_i32, %c0_i32_0 : i32, i32, i32
  }
  func.func @transform_2(%arg0: i32, %arg1: i32, %arg2: i32) -> (i32, i32) {
    %c1_i32 = arith.constant 1 : i32
    %0 = arith.muli %arg0, %c1_i32 : i32
    %1 = arith.addi %0, %arg2 : i32
    %c0_i32 = arith.constant 0 : i32
    %c0_i32_0 = arith.constant 0 : i32
    return %1, %c0_i32 : i32, i32
  }
  func.func @transform_3(%arg0: i32, %arg1: i32, %arg2: i32) -> (i32, i32, i32) {
    %c0_i32 = arith.constant 0 : i32
    %c0_i32_0 = arith.constant 0 : i32
    return %arg0, %arg1, %c0_i32 : i32, i32, i32
  }
}

</mosaic_0001>

<llo_original>
// kernel: mlp_pallas.1
$region0: #{mlp_pallas.1}
  #allocation0 [shape = 'u32[]', space=smem, size = 0x4, offset = 0x4, fixed_abs, tag = 'smem constant byte address 0x4 - core index']
  #allocation1 [shape = 'u32[144,128]{1,0:T(1,128)}', space=vmem, size = 0x12000, scoped, tag = 'internal scratch']
  #allocation2 [shape = 'f32[16,128]{1,0:T(8,128)}', space=vmem, size = 0x2000, scoped, tag = 'scratch operand']
  %s0 = inlined_call_operand.hbm [shape: bf16[16,128], index: 0, kind: input, shape index: {}]
  %s1 = inlined_call_operand.hbm [shape: bf16[2,128,512], index: 1, kind: input, shape index: {}]
  %s2 = inlined_call_operand.hbm [shape: bf16[512,128], index: 2, kind: input, shape index: {}]
  %s3 = inlined_call_operand.vmem [shape: f32[2,16,128], index: 3, kind: output, shape index: {}]
  %s4 = sld [smem:[#allocation0]]
  $region69: #{mlp_pallas.1} parent=0
    _
  %s6 = ssub.s32 1, %s4
  %s7 = scalar_select 0, %s6, %s4
  $region1: #{mlp_pallas.1} parent=0
    #allocation3 [shape = 'u8[4096]{0}', space=vmem, size = 0x1000, scoped, tag = 'input window, operand 0, single buffered']
    #allocation4 [shape = 's32[2]{0}', space=sflag, size = 0x8, scoped, tag = 'scoped memory for mlp_pallas.1']
    #allocation5 [shape = 'u8[262144]{0}', space=vmem, size = 0x40000, scoped, tag = 'input window, operand 1']
    #allocation6 [shape = 's32[2]{0}', space=sflag, size = 0x8, scoped, tag = 'scoped memory for mlp_pallas.1']
    #allocation7 [shape = 'u8[131072]{0}', space=vmem, size = 0x20000, scoped, tag = 'input window, operand 2']
    %8 = vsyncpa [#allocation4], 0
    %9 = vsyncpa [#allocation6], 0
    %s10 = scalar_lea.sflag [#allocation6], 1
    %11 = vsyncpa %s10, 0
    loop: start=0, step=1, limit=4
    $region2: #{mlp_pallas.1} parent=1 // loop_pre_header
      _
    $region3: #{mlp_pallas.1} parent=1 // loop_header
      %s13 = sphi 0, %s17
      %p14 = scmp.ge.s32.totalorder %s13, 4
      %s20 = sphi 0, %s39
      %s21 = sphi 0, %s35
      %s22 = sphi 0, %s31
      %s23 = sphi 0, %s20
      %s24 = sphi 0, %s21
      %s25 = sphi 0, %s22
      %s26 = sphi 0, %s23
      %s27 = sphi 0, %s24
      %s28 = sphi 0, %s25
      %s42 = sphi 0, %s44
      %s45 = sphi 0, %s42
      %s46 = sphi 0, %s45
      %s62 = sphi 0, %s46
      %s70 = sphi 0, %s72
      %s73 = sphi 0, %s70
      %s74 = sphi 0, %s73
      %s90 = sphi 0, %s74
      %s98 = sphi 0, %s100
      %s101 = sphi 0, %s98
      %s102 = sphi 0, %s101
      %s118 = sphi 0, %s102
      %s126 = sphi 0, %s128
      %s129 = sphi 0, %s126
      %s130 = sphi 0, %s129
      %s146 = sphi 0, %s130
    $region4: #{mlp_pallas.1} parent=1 // loop_header_branch
      %16 = sbr.rel (%p14) target = $region8
    $region5: #{mlp_pallas.1} parent=1 // loop_body
      %s18 = ssub.s32 %s13, 1
      %s19 = ssub.s32 %s13, 2
      %s29 = sadd.s32 1, %s22
      %p30 = scmp.ge.s32.totalorder %s29, 1
      %s31 = scalar_select %p30, 0, %s29
      %s32 = sadd.s32 1, %s21
      %s33 = scalar_select %p30, %s32, %s21
      %p34 = scmp.ge.s32.totalorder %s33, 1
      %s35 = scalar_select %p34, 0, %s33
      %s36 = sadd.s32 1, %s20
      %s37 = scalar_select %p34, %s36, %s20
      %p38 = scmp.ge.s32.totalorder %s37, 2
      %s39 = scalar_select %p38, 0, %s37
      %s40 = ssub.s32 %s21, %s35
      %p41 = scmp.eq.s32.totalorder %s40, 0
      %s43 = sadd.s32 %s42, 1
      %s44 = scalar_select %p41, %s42, %s43
      %p47 = pneg %p41
      %p48 = scmp.eq.s32.totalorder %s13, 1
      %p49 = por %p47, %p48
      %p50 = scmp.ne.s32.totalorder %s42, %s45
      %p51 = scmp.eq.s32.totalorder %s13, 0
      %p52 = por %p50, %p51
      %p53 = scmp.ne.s32.totalorder %s42, %s45
      %p54 = scmp.eq.s32.totalorder %s18, 1
      %p55 = por %p53, %p54
      %p56 = scmp.ne.s32.totalorder %s45, %s46
      %p57 = scmp.eq.s32.totalorder %s18, 0
      %p58 = por %p56, %p57
      %p59 = scmp.ne.s32.totalorder %s45, %s46
      %p60 = scmp.eq.s32.totalorder %s19, 1
      %p61 = por %p59, %p60
      %p63 = scmp.ne.s32.totalorder %s46, %s62
      %p64 = scmp.eq.s32.totalorder %s19, 0
      %p65 = por %p63, %p64
      %s66 = sadd.s32 %s20, %s22
      %s67 = sadd.s32 %s39, %s31
      %s68 = ssub.s32 %s66, %s67
      %p69 = scmp.eq.s32.totalorder %s68, 0
      %s71 = sadd.s32 %s70, 1
      %s72 = scalar_select %p69, %s70, %s71
      %p75 = pneg %p69
      %p76 = scmp.eq.s32.totalorder %s13, 1
      %p77 = por %p75, %p76
      %p78 = scmp.ne.s32.totalorder %s70, %s73
      %p79 = scmp.eq.s32.totalorder %s13, 0
      %p80 = por %p78, %p79
      %p81 = scmp.ne.s32.totalorder %s70, %s73
      %p82 = scmp.eq.s32.totalorder %s18, 1
      %p83 = por %p81, %p82
      %p84 = scmp.ne.s32.totalorder %s73, %s74
      %p85 = scmp.eq.s32.totalorder %s18, 0
      %p86 = por %p84, %p85
      %p87 = scmp.ne.s32.totalorder %s73, %s74
      %p88 = scmp.eq.s32.totalorder %s19, 1
      %p89 = por %p87, %p88
      %p91 = scmp.ne.s32.totalorder %s74, %s90
      %p92 = scmp.eq.s32.totalorder %s19, 0
      %p93 = por %p91, %p92
      %s94 = sadd.s32 %s20, %s22
      %s95 = sadd.s32 %s39, %s31
      %s96 = ssub.s32 %s94, %s95
      %p97 = scmp.eq.s32.totalorder %s96, 0
      %s99 = sadd.s32 %s98, 1
      %s100 = scalar_select %p97, %s98, %s99
      %p103 = pneg %p97
      %p104 = scmp.eq.s32.totalorder %s13, 1
      %p105 = por %p103, %p104
      %p106 = scmp.ne.s32.totalorder %s98, %s101
      %p107 = scmp.eq.s32.totalorder %s13, 0
      %p108 = por %p106, %p107
      %p109 = scmp.ne.s32.totalorder %s98, %s101
      %p110 = scmp.eq.s32.totalorder %s18, 1
      %p111 = por %p109, %p110
      %p112 = scmp.ne.s32.totalorder %s101, %s102
      %p113 = scmp.eq.s32.totalorder %s18, 0
      %p114 = por %p112, %p113
      %p115 = scmp.ne.s32.totalorder %s101, %s102
      %p116 = scmp.eq.s32.totalorder %s19, 1
      %p117 = por %p115, %p116
      %p119 = scmp.ne.s32.totalorder %s102, %s118
      %p120 = scmp.eq.s32.totalorder %s19, 0
      %p121 = por %p119, %p120
      %s122 = ssub.s32 %s20, %s39
      %s123 = ssub.s32 %s21, %s35
      %s124 = sor.u32 %s122, %s123
      %p125 = scmp.eq.s32.totalorder %s124, 0
      %s127 = sadd.s32 %s126, 1
      %s128 = scalar_select %p125, %s126, %s127
      %p131 = pneg %p125
      %p132 = scmp.eq.s32.totalorder %s13, 1
      %p133 = por %p131, %p132
      %p134 = scmp.ne.s32.totalorder %s126, %s129
      %p135 = scmp.eq.s32.totalorder %s13, 0
      %p136 = por %p134, %p135
      %p137 = scmp.ne.s32.totalorder %s126, %s129
      %p138 = scmp.eq.s32.totalorder %s18, 1
      %p139 = por %p137, %p138
      %p140 = scmp.ne.s32.totalorder %s129, %s130
      %p141 = scmp.eq.s32.totalorder %s18, 0
      %p142 = por %p140, %p141
      %p143 = scmp.ne.s32.totalorder %s129, %s130
      %p144 = scmp.eq.s32.totalorder %s19, 1
      %p145 = por %p143, %p144
      %p147 = scmp.ne.s32.totalorder %s130, %s146
      %p148 = scmp.eq.s32.totalorder %s19, 0
      %p149 = por %p147, %p148
      %p150 = scmp.le.s32.totalorder 1, %s13
      %p151 = scmp.lt.s32.totalorder %s13, 3
      %p152 = pnand %p150, %p151
      %p153 = pneg %p152
      // Predicated region
      $region9: #{mlp_pallas.1} parent=5 // pred_check
        _
      $region10: #{mlp_pallas.1} parent=5 // pred_check_branch
        %155 = sbr.rel (%p152) target = $region12
      $region11: #{mlp_pallas.1} parent=5 // pred_region
        %s156 = ssub.s32 %s13, 1
        // Predicated region
        $region13: #{mlp_pallas.1} parent=11 // pred_check
          %p157 = pneg %p58
        $region14: #{mlp_pallas.1} parent=11 // pred_check_branch
          %159 = sbr.rel (%p157) target = $region16
        $region15: #{mlp_pallas.1} parent=11 // pred_region
          %s160 = smul.u32 2, %s24
          %s162 = ssub.s32 128, 128
          %163 = vsyncadd [#allocation4], %s162
          %s164 = smul.addr %s160, 64
          %s165 = scalar_lea.hbm %s0, %s164
          %s166 = sshll.u32 [#allocation3], 4
          %s167 = int_to_ptr.vmem [resolvable:$true] %s166
          %172 = dma.hbm_to_vmem [thread:$0]  %s165, 128, %s167, [#allocation4], 64, 64, 4
        $region16: #{mlp_pallas.1} parent=11 // pred_fallthru
          _
      $region12: #{mlp_pallas.1} parent=5 // pred_fallthru
        _
      %p173 = scmp.lt.s32.totalorder %s13, 2
      // Predicated region
      $region17: #{mlp_pallas.1} parent=5 // pred_check
        %p174 = pneg %p173
      $region18: #{mlp_pallas.1} parent=5 // pred_check_branch
        %176 = sbr.rel (%p174) target = $region20
      $region19: #{mlp_pallas.1} parent=5 // pred_region
        // Predicated region
        $region21: #{mlp_pallas.1} parent=19 // pred_check
          %p177 = pneg %p80
        $region22: #{mlp_pallas.1} parent=19 // pred_check_branch
          %179 = sbr.rel (%p177) target = $region24
        $region23: #{mlp_pallas.1} parent=19 // pred_region
          %s180 = sand.u32 %s13, 1
          %s181 = scalar_lea.sflag [#allocation6], %s180
          %s182 = sand.u32 %s70, 1
          %s183 = smul.addr %s182, 256
          %s184 = scalar_lea.vmem [#allocation5], %s183
          %s185 = sadd.s32 %s20, %s22
          %s187 = ssub.s32 4096, 4096
          %188 = vsyncadd %s181, %s187
          %s189 = smul.addr %s185, 64
          %s190 = smul.addr %s189, 64
          %s191 = scalar_lea.hbm %s1, %s190
          %s192 = sshll.u32 %s184, 4
          %s193 = int_to_ptr.vmem [resolvable:$true] %s192
          %198 = dma.hbm_to_vmem [thread:$0]  %s191, 4096, %s193, %s181, 256, 256, 16
        $region24: #{mlp_pallas.1} parent=19 // pred_fallthru
          _
        // Predicated region
        $region25: #{mlp_pallas.1} parent=19 // pred_check
          %p199 = pneg %p108
        $region26: #{mlp_pallas.1} parent=19 // pred_check_branch
          %201 = sbr.rel (%p199) target = $region28
        $region27: #{mlp_pallas.1} parent=19 // pred_region
          %s202 = sand.u32 %s13, 1
          %s203 = scalar_lea.sflag [#allocation6], %s202
          %s204 = sand.u32 %s98, 1
          %s205 = smul.addr %s204, 128
          %s206 = scalar_lea.vmem [#allocation7], %s205
          %s207 = sadd.s32 %s20, %s22
          %s208 = smul.u32 32, %s207
          %s210 = ssub.s32 2048, 2048
          %211 = vsyncadd %s203, %s210
          %s212 = smul.addr %s208, 64
          %s213 = scalar_lea.hbm %s2, %s212
          %s214 = sshll.u32 %s206, 4
          %s215 = int_to_ptr.vmem [resolvable:$true] %s214
          %220 = dma.hbm_to_vmem [thread:$0]  %s213, 2048, %s215, %s203, 64, 64, 4
        $region28: #{mlp_pallas.1} parent=19 // pred_fallthru
          _
      $region20: #{mlp_pallas.1} parent=5 // pred_fallthru
        _
      %p221 = scmp.le.s32.totalorder 1, %s13
      %p222 = scmp.lt.s32.totalorder %s13, 3
      %p223 = pnand %p221, %p222
      %p224 = pneg %p223
      // Predicated region
      $region29: #{mlp_pallas.1} parent=5 // pred_check
        _
      $region30: #{mlp_pallas.1} parent=5 // pred_check_branch
        %226 = sbr.rel (%p223) target = $region32
      $region31: #{mlp_pallas.1} parent=5 // pred_region
        %s227 = ssub.s32 %s13, 1
        // Predicated region
        $region33: #{mlp_pallas.1} parent=31 // pred_check
          %p228 = pneg %p58
        $region34: #{mlp_pallas.1} parent=31 // pred_check_branch
          %230 = sbr.rel (%p228) target = $region36
        $region35: #{mlp_pallas.1} parent=31 // pred_region
          %231 = dma.done [#allocation4], 128
        $region36: #{mlp_pallas.1} parent=31 // pred_fallthru
          _
        %s232 = sand.u32 %s18, 1
        %s233 = scalar_lea.sflag [#allocation6], %s232
        %s234 = sand.u32 %s73, 1
        %s235 = smul.addr %s234, 256
        %s236 = scalar_lea.vmem [#allocation5], %s235
        // Predicated region
        $region37: #{mlp_pallas.1} parent=31 // pred_check
          %p237 = pneg %p86
        $region38: #{mlp_pallas.1} parent=31 // pred_check_branch
          %239 = sbr.rel (%p237) target = $region40
        $region39: #{mlp_pallas.1} parent=31 // pred_region
          %240 = dma.done %s233, 4096
        $region40: #{mlp_pallas.1} parent=31 // pred_fallthru
          _
        %s241 = sand.u32 %s18, 1
        %s242 = scalar_lea.sflag [#allocation6], %s241
        %s243 = sand.u32 %s101, 1
        %s244 = smul.addr %s243, 128
        %s245 = scalar_lea.vmem [#allocation7], %s244
        // Predicated region
        $region41: #{mlp_pallas.1} parent=31 // pred_check
          %p246 = pneg %p114
        $region42: #{mlp_pallas.1} parent=31 // pred_check_branch
          %248 = sbr.rel (%p246) target = $region44
        $region43: #{mlp_pallas.1} parent=31 // pred_region
          %249 = dma.done %s242, 2048
        $region44: #{mlp_pallas.1} parent=31 // pred_fallthru
          _
        %p250 = pneg %p58
        %p251 = pneg %p55
        %s252 = sand.u32 %s18, 1
        %s253 = scalar_lea.sflag [#allocation6], %s252
        %s254 = sand.u32 %s73, 1
        %s255 = smul.addr %s254, 256
        %s256 = scalar_lea.vmem [#allocation5], %s255
        %p257 = pneg %p86
        %p258 = pneg %p83
        %s259 = sand.u32 %s18, 1
        %s260 = scalar_lea.sflag [#allocation6], %s259
        %s261 = sand.u32 %s101, 1
        %s262 = smul.addr %s261, 128
        %s263 = scalar_lea.vmem [#allocation7], %s262
        %p264 = pneg %p114
        %p265 = pneg %p111
        %p266 = pneg %p142
        %p267 = pneg %p139
        %s268 = smul.u32 2, %s24
        %p269 = scmp.lt.s32.totalorder %s23, 1
        %s270 = scalar_select %p269, %s23, 1
        %p271 = scmp.lt.s32.totalorder %s268, 1
        %s272 = scalar_select %p271, %s268, 1
        %s273 = smul.addr %s270, 2
        %s274 = sadd.s32 %s272, %s273
        %s275 = smul.addr %s274, 8
        %s276 = scalar_lea.vmem %s3, %s275
        %s277 = smul.u32 2, %s24
        %s278 = sadd.s32 %s23, %s25
        %s279 = sadd.s32 %s23, %s25
        %s280 = smul.u32 32, %s279
        %s281 = smul.u32 2, %s24
        %p282 = scmp.lt.s32.totalorder %s23, 1
        %s283 = scalar_select %p282, %s23, 1
        %p284 = scmp.lt.s32.totalorder %s281, 1
        %s285 = scalar_select %p284, %s281, 1
        %s286 = smul.addr %s283, 2
        %s287 = sadd.s32 %s285, %s286
        %s288 = smul.addr %s287, 8
        %s289 = scalar_lea.vmem %s3, %s288
        %s290 = smul.u32 2, %s24
        %v292 = vld [vmem:[#allocation3] sm:$0xf]
        %v293 = vld [vmem:[#allocation3 + $0x4] sm:$0xf]
        %v294 = vld [vmem:[%s236] sm:$0xff]
        %v295 = vld [vmem:[%s236 + $0x8] sm:$0xff]
        %v296 = vld [vmem:[%s236 + $0x10] sm:$0xff]
        %v297 = vld [vmem:[%s236 + $0x18] sm:$0xff]
        %v298 = vld [vmem:[%s236 + $0x20] sm:$0xff]
        %v299 = vld [vmem:[%s236 + $0x28] sm:$0xff]
        %v300 = vld [vmem:[%s236 + $0x30] sm:$0xff]
        %v301 = vld [vmem:[%s236 + $0x38] sm:$0xff]
        %v302 = vld [vmem:[%s236 + $0x40] sm:$0xff]
        %v303 = vld [vmem:[%s236 + $0x48] sm:$0xff]
        %v304 = vld [vmem:[%s236 + $0x50] sm:$0xff]
        %v305 = vld [vmem:[%s236 + $0x58] sm:$0xff]
        %v306 = vld [vmem:[%s236 + $0x60] sm:$0xff]
        %v307 = vld [vmem:[%s236 + $0x68] sm:$0xff]
        %v308 = vld [vmem:[%s236 + $0x70] sm:$0xff]
        %v309 = vld [vmem:[%s236 + $0x78] sm:$0xff]
        %v310 = vld [vmem:[%s236 + $0x80] sm:$0xff]
        %v311 = vld [vmem:[%s236 + $0x88] sm:$0xff]
        %v312 = vld [vmem:[%s236 + $0x90] sm:$0xff]
        %v313 = vld [vmem:[%s236 + $0x98] sm:$0xff]
        %v314 = vld [vmem:[%s236 + $0xa0] sm:$0xff]
        %v315 = vld [vmem:[%s236 + $0xa8] sm:$0xff]
        %v316 = vld [vmem:[%s236 + $0xb0] sm:$0xff]
        %v317 = vld [vmem:[%s236 + $0xb8] sm:$0xff]
        %v318 = vld [vmem:[%s236 + $0xc0] sm:$0xff]
        %v319 = vld [vmem:[%s236 + $0xc8] sm:$0xff]
        %v320 = vld [vmem:[%s236 + $0xd0] sm:$0xff]
        %v321 = vld [vmem:[%s236 + $0xd8] sm:$0xff]
        %v322 = vld [vmem:[%s236 + $0xe0] sm:$0xff]
        %v323 = vld [vmem:[%s236 + $0xe8] sm:$0xff]
        %v324 = vld [vmem:[%s236 + $0xf0] sm:$0xff]
        %v325 = vld [vmem:[%s236 + $0xf8] sm:$0xff]
        %v328 = vunpack.c.l.b16 %v292
        %v329 = vunpack.c.l.b16 %v293
        %v330 = vpack.c.b16 %v329, %v328
        %v364 = vunpack.c.l.b16 %v294
        %v365 = vunpack.c.h.b16 %v294
        %v366 = vunpack.c.l.b16 %v295
        %v367 = vunpack.c.h.b16 %v295
        %v368 = vunpack.c.l.b16 %v296
        %v369 = vunpack.c.h.b16 %v296
        %v370 = vunpack.c.l.b16 %v297
        %v371 = vunpack.c.h.b16 %v297
        %v372 = vunpack.c.l.b16 %v298
        %v373 = vunpack.c.h.b16 %v298
        %v374 = vunpack.c.l.b16 %v299
        %v375 = vunpack.c.h.b16 %v299
        %v376 = vunpack.c.l.b16 %v300
        %v377 = vunpack.c.h.b16 %v300
        %v378 = vunpack.c.l.b16 %v301
        %v379 = vunpack.c.h.b16 %v301
        %v380 = vunpack.c.l.b16 %v302
        %v381 = vunpack.c.h.b16 %v302
        %v382 = vunpack.c.l.b16 %v303
        %v383 = vunpack.c.h.b16 %v303
        %v384 = vunpack.c.l.b16 %v304
        %v385 = vunpack.c.h.b16 %v304
        %v386 = vunpack.c.l.b16 %v305
        %v387 = vunpack.c.h.b16 %v305
        %v388 = vunpack.c.l.b16 %v306
        %v389 = vunpack.c.h.b16 %v306
        %v390 = vunpack.c.l.b16 %v307
        %v391 = vunpack.c.h.b16 %v307
        %v392 = vunpack.c.l.b16 %v308
        %v393 = vunpack.c.h.b16 %v308
        %v394 = vunpack.c.l.b16 %v309
        %v395 = vunpack.c.h.b16 %v309
        %v396 = vunpack.c.l.b16 %v310
        %v397 = vunpack.c.h.b16 %v310
        %v398 = vunpack.c.l.b16 %v311
        %v399 = vunpack.c.h.b16 %v311
        %v400 = vunpack.c.l.b16 %v312
        %v401 = vunpack.c.h.b16 %v312
        %v402 = vunpack.c.l.b16 %v313
        %v403 = vunpack.c.h.b16 %v313
        %v404 = vunpack.c.l.b16 %v314
        %v405 = vunpack.c.h.b16 %v314
        %v406 = vunpack.c.l.b16 %v315
        %v407 = vunpack.c.h.b16 %v315
        %v408 = vunpack.c.l.b16 %v316
        %v409 = vunpack.c.h.b16 %v316
        %v410 = vunpack.c.l.b16 %v317
        %v411 = vunpack.c.h.b16 %v317
        %v412 = vunpack.c.l.b16 %v318
        %v413 = vunpack.c.h.b16 %v318
        %v414 = vunpack.c.l.b16 %v319
        %v415 = vunpack.c.h.b16 %v319
        %v416 = vunpack.c.l.b16 %v320
        %v417 = vunpack.c.h.b16 %v320
        %v418 = vunpack.c.l.b16 %v321
        %v419 = vunpack.c.h.b16 %v321
        %v420 = vunpack.c.l.b16 %v322
        %v421 = vunpack.c.h.b16 %v322
        %v422 = vunpack.c.l.b16 %v323
        %v423 = vunpack.c.h.b16 %v323
        %v424 = vunpack.c.l.b16 %v324
        %v425 = vunpack.c.h.b16 %v324
        %v426 = vunpack.c.l.b16 %v325
        %v427 = vunpack.c.h.b16 %v325
        %v428 = vpack.c.b16 %v368, %v364
        %v429 = vpack.c.b16 %v369, %v365
        %v430 = vpack.c.b16 %v370, %v366
        %v431 = vpack.c.b16 %v371, %v367
        %v432 = vpack.c.b16 %v376, %v372
        %v433 = vpack.c.b16 %v377, %v373
        %v434 = vpack.c.b16 %v378, %v374
        %v435 = vpack.c.b16 %v379, %v375
        %v436 = vpack.c.b16 %v384, %v380
        %v437 = vpack.c.b16 %v385, %v381
        %v438 = vpack.c.b16 %v386, %v382
        %v439 = vpack.c.b16 %v387, %v383
        %v440 = vpack.c.b16 %v392, %v388
        %v441 = vpack.c.b16 %v393, %v389
        %v442 = vpack.c.b16 %v394, %v390
        %v443 = vpack.c.b16 %v395, %v391
        %v444 = vpack.c.b16 %v400, %v396
        %v445 = vpack.c.b16 %v401, %v397
        %v446 = vpack.c.b16 %v402, %v398
        %v447 = vpack.c.b16 %v403, %v399
        %v448 = vpack.c.b16 %v408, %v404
        %v449 = vpack.c.b16 %v409, %v405
        %v450 = vpack.c.b16 %v410, %v406
        %v451 = vpack.c.b16 %v411, %v407
        %v452 = vpack.c.b16 %v416, %v412
        %v453 = vpack.c.b16 %v417, %v413
        %v454 = vpack.c.b16 %v418, %v414
        %v455 = vpack.c.b16 %v419, %v415
        %v456 = vpack.c.b16 %v424, %v420
        %v457 = vpack.c.b16 %v425, %v421
        %v458 = vpack.c.b16 %v426, %v422
        %v459 = vpack.c.b16 %v427, %v423
        %492 = vmatprep.subr.bf16.mxu0 %v457
        %493 = vmatpush1.bf16.msra.mxu0 %v456
        %494 = vmatprep.subr.bf16.mxu0 %v453
        %495 = vmatpush1.bf16.msra.mxu0 %v452
        %496 = vmatprep.subr.bf16.mxu0 %v449
        %497 = vmatpush1.bf16.msra.mxu0 %v448
        %498 = vmatprep.subr.bf16.mxu0 %v445
        %499 = vmatpush1.bf16.msra.mxu0 %v444
        %500 = vmatprep.subr.bf16.mxu0 %v441
        %501 = vmatpush1.bf16.msra.mxu0 %v440
        %502 = vmatprep.subr.bf16.mxu0 %v437
        %503 = vmatpush1.bf16.msra.mxu0 %v436
        %504 = vmatprep.subr.bf16.mxu0 %v433
        %505 = vmatpush1.bf16.msra.mxu0 %v432
        %506 = vmatprep.subr.bf16.mxu0 %v429
        %507 = vmatpush1.bf16.msra.mxu0 %v428
        %508 = vmatprep.subr.bf16.mxu0 0
        %509 = vmatpush2.bf16.msra.mxu0 0
        %510 = vmatprep.subr.bf16.mxu0 0
        %511 = vmatpush2.bf16.msra.mxu0 0
        %512 = vmatprep.subr.bf16.mxu0 0
        %513 = vmatpush2.bf16.msra.mxu0 0
        %514 = vmatprep.subr.bf16.mxu0 0
        %515 = vmatpush2.bf16.msra.mxu0 0
        %516 = vmatprep.subr.bf16.mxu0 0
        %517 = vmatpush2.bf16.msra.mxu0 0
        %518 = vmatprep.subr.bf16.mxu0 0
        %519 = vmatpush2.bf16.msra.mxu0 0
        %520 = vmatprep.subr.bf16.mxu0 0
        %521 = vmatpush2.bf16.msra.mxu0 0
        %522 = vmatprep.subr.bf16.mxu0 0
        %523 = vmatpush2.bf16.msra.mxu0 0
        %524 = vmatprep.mubr.bf16.mxu0 0
        %525 = vmatmul.mubr.bf16.gmra.mxu0 %v330
        %v526 = vpop.f32.mrf.mxu0
        %v527 = vadd.f32 0.0, %v526
        %v528 = vpop.f32.mrf.mxu0
        %v529 = vadd.f32 0.0, %v528
        %v530 = vpop.f32.mrf.mxu0
        %v531 = vadd.f32 0.0, %v530
        %v532 = vpop.f32.mrf.mxu0
        %v533 = vadd.f32 0.0, %v532
        %534 = vdwg.mxu0
        %535 = vmatprep.subr.bf16.mxu0 %v459
        %536 = vmatpush1.bf16.msra.mxu0 %v458
        %537 = vmatprep.subr.bf16.mxu0 %v455
        %538 = vmatpush1.bf16.msra.mxu0 %v454
        %539 = vmatprep.subr.bf16.mxu0 %v451
        %540 = vmatpush1.bf16.msra.mxu0 %v450
        %541 = vmatprep.subr.bf16.mxu0 %v447
        %542 = vmatpush1.bf16.msra.mxu0 %v446
        %543 = vmatprep.subr.bf16.mxu0 %v443
        %544 = vmatpush1.bf16.msra.mxu0 %v442
        %545 = vmatprep.subr.bf16.mxu0 %v439
        %546 = vmatpush1.bf16.msra.mxu0 %v438
        %547 = vmatprep.subr.bf16.mxu0 %v435
        %548 = vmatpush1.bf16.msra.mxu0 %v434
        %549 = vmatprep.subr.bf16.mxu0 %v431
        %550 = vmatpush1.bf16.msra.mxu0 %v430
        %551 = vmatprep.subr.bf16.mxu0 0
        %552 = vmatpush2.bf16.msra.mxu0 0
        %553 = vmatprep.subr.bf16.mxu0 0
        %554 = vmatpush2.bf16.msra.mxu0 0
        %555 = vmatprep.subr.bf16.mxu0 0
        %556 = vmatpush2.bf16.msra.mxu0 0
        %557 = vmatprep.subr.bf16.mxu0 0
        %558 = vmatpush2.bf16.msra.mxu0 0
        %559 = vmatprep.subr.bf16.mxu0 0
        %560 = vmatpush2.bf16.msra.mxu0 0
        %561 = vmatprep.subr.bf16.mxu0 0
        %562 = vmatpush2.bf16.msra.mxu0 0
        %563 = vmatprep.subr.bf16.mxu0 0
        %564 = vmatpush2.bf16.msra.mxu0 0
        %565 = vmatprep.subr.bf16.mxu0 0
        %566 = vmatpush2.bf16.msra.mxu0 0
        %567 = vmatprep.mubr.bf16.mxu0 0
        %568 = vmatmul.mubr.bf16.gmra.mxu0 %v330
        %v569 = vpop.f32.mrf.mxu0
        %v570 = vadd.f32 0.0, %v569
        %v571 = vpop.f32.mrf.mxu0
        %v572 = vadd.f32 0.0, %v571
        %v573 = vpop.f32.mrf.mxu0
        %v574 = vadd.f32 0.0, %v573
        %v575 = vpop.f32.mrf.mxu0
        %v576 = vadd.f32 0.0, %v575
        %577 = vdwg.mxu0
        %v578 = vxor.u32 %v527, 2147483648
        %v579 = vxor.u32 %v529, 2147483648
        %v580 = vxor.u32 %v531, 2147483648
        %v581 = vxor.u32 %v533, 2147483648
        %v582 = vmul.f32 %v578, 1.442695
        %v583 = vpow.pop %v582
        %v584 = vmul.f32 %v579, 1.442695
        %v585 = vpow.pop %v584
        %v586 = vmul.f32 %v580, 1.442695
        %v587 = vpow.pop %v586
        %v588 = vmul.f32 %v581, 1.442695
        %v589 = vpow.pop %v588
        %v590 = vadd.f32 %v583, 1.0
        %v591 = vadd.f32 %v585, 1.0
        %v592 = vadd.f32 %v587, 1.0
        %v593 = vadd.f32 %v589, 1.0
        %v594 = vrcp.pop %v590
        %v595 = vmul.f32 1.0, %v594
        %v596 = vrcp.pop %v591
        %v597 = vmul.f32 1.0, %v596
        %v598 = vrcp.pop %v592
        %v599 = vmul.f32 1.0, %v598
        %v600 = vrcp.pop %v593
        %v601 = vmul.f32 1.0, %v600
        %v602 = vmul.f32 %v527, %v595
        %v603 = vmul.f32 %v529, %v597
        %v604 = vmul.f32 %v531, %v599
        %v605 = vmul.f32 %v533, %v601
        %v606 = vmul.f32 %v602, %v570
        %v607 = vmul.f32 %v603, %v572
        %v608 = vmul.f32 %v604, %v574
        %v609 = vmul.f32 %v605, %v576
        %v610 = vpack.c.bf16 %v608, %v606
        %v611 = vpack.c.bf16 %v609, %v607
        %v612 = vld [vmem:[%s245] sm:$0xf]
        %v613 = vld [vmem:[%s245 + $0x4] sm:$0xf]
        %v614 = vld [vmem:[%s245 + $0x8] sm:$0xf]
        %v615 = vld [vmem:[%s245 + $0xc] sm:$0xf]
        %v616 = vld [vmem:[%s245 + $0x10] sm:$0xf]
        %v617 = vld [vmem:[%s245 + $0x14] sm:$0xf]
        %v618 = vld [vmem:[%s245 + $0x18] sm:$0xf]
        %v619 = vld [vmem:[%s245 + $0x1c] sm:$0xf]
        %v620 = vld [vmem:[%s245 + $0x20] sm:$0xf]
        %v621 = vld [vmem:[%s245 + $0x24] sm:$0xf]
        %v622 = vld [vmem:[%s245 + $0x28] sm:$0xf]
        %v623 = vld [vmem:[%s245 + $0x2c] sm:$0xf]
        %v624 = vld [vmem:[%s245 + $0x30] sm:$0xf]
        %v625 = vld [vmem:[%s245 + $0x34] sm:$0xf]
        %v626 = vld [vmem:[%s245 + $0x38] sm:$0xf]
        %v627 = vld [vmem:[%s245 + $0x3c] sm:$0xf]
        %v628 = vld [vmem:[%s245 + $0x40] sm:$0xf]
        %v629 = vld [vmem:[%s245 + $0x44] sm:$0xf]
        %v630 = vld [vmem:[%s245 + $0x48] sm:$0xf]
        %v631 = vld [vmem:[%s245 + $0x4c] sm:$0xf]
        %v632 = vld [vmem:[%s245 + $0x50] sm:$0xf]
        %v633 = vld [vmem:[%s245 + $0x54] sm:$0xf]
        %v634 = vld [vmem:[%s245 + $0x58] sm:$0xf]
        %v635 = vld [vmem:[%s245 + $0x5c] sm:$0xf]
        %v636 = vld [vmem:[%s245 + $0x60] sm:$0xf]
        %v637 = vld [vmem:[%s245 + $0x64] sm:$0xf]
        %v638 = vld [vmem:[%s245 + $0x68] sm:$0xf]
        %v639 = vld [vmem:[%s245 + $0x6c] sm:$0xf]
        %v640 = vld [vmem:[%s245 + $0x70] sm:$0xf]
        %v641 = vld [vmem:[%s245 + $0x74] sm:$0xf]
        %v642 = vld [vmem:[%s245 + $0x78] sm:$0xf]
        %v643 = vld [vmem:[%s245 + $0x7c] sm:$0xf]
        %v676 = vunpack.c.l.b16 %v612
        %v677 = vunpack.c.l.b16 %v613
        %v678 = vunpack.c.l.b16 %v614
        %v679 = vunpack.c.l.b16 %v615
        %v680 = vunpack.c.l.b16 %v616
        %v681 = vunpack.c.l.b16 %v617
        %v682 = vunpack.c.l.b16 %v618
        %v683 = vunpack.c.l.b16 %v619
        %v684 = vunpack.c.l.b16 %v620
        %v685 = vunpack.c.l.b16 %v621
        %v686 = vunpack.c.l.b16 %v622
        %v687 = vunpack.c.l.b16 %v623
        %v688 = vunpack.c.l.b16 %v624
        %v689 = vunpack.c.l.b16 %v625
        %v690 = vunpack.c.l.b16 %v626
        %v691 = vunpack.c.l.b16 %v627
        %v692 = vunpack.c.l.b16 %v628
        %v693 = vunpack.c.l.b16 %v629
        %v694 = vunpack.c.l.b16 %v630
        %v695 = vunpack.c.l.b16 %v631
        %v696 = vunpack.c.l.b16 %v632
        %v697 = vunpack.c.l.b16 %v633
        %v698 = vunpack.c.l.b16 %v634
        %v699 = vunpack.c.l.b16 %v635
        %v700 = vunpack.c.l.b16 %v636
        %v701 = vunpack.c.l.b16 %v637
        %v702 = vunpack.c.l.b16 %v638
        %v703 = vunpack.c.l.b16 %v639
        %v704 = vunpack.c.l.b16 %v640
        %v705 = vunpack.c.l.b16 %v641
        %v706 = vunpack.c.l.b16 %v642
        %v707 = vunpack.c.l.b16 %v643
        %v708 = vpack.c.b16 %v677, %v676
        %v709 = vpack.c.b16 %v679, %v678
        %v710 = vpack.c.b16 %v681, %v680
        %v711 = vpack.c.b16 %v683, %v682
        %v712 = vpack.c.b16 %v685, %v684
        %v713 = vpack.c.b16 %v687, %v686
        %v714 = vpack.c.b16 %v689, %v688
        %v715 = vpack.c.b16 %v691, %v690
        %v716 = vpack.c.b16 %v693, %v692
        %v717 = vpack.c.b16 %v695, %v694
        %v718 = vpack.c.b16 %v697, %v696
        %v719 = vpack.c.b16 %v699, %v698
        %v720 = vpack.c.b16 %v701, %v700
        %v721 = vpack.c.b16 %v703, %v702
        %v722 = vpack.c.b16 %v705, %v704
        %v723 = vpack.c.b16 %v707, %v706
        %740 = vmatprep.subr.bf16.mxu0 0
        %741 = vmatpush1.bf16.msra.mxu0 %v715
        %742 = vmatprep.subr.bf16.mxu0 0
        %743 = vmatpush1.bf16.msra.mxu0 %v714
        %744 = vmatprep.subr.bf16.mxu0 0
        %745 = vmatpush1.bf16.msra.mxu0 %v713
        %746 = vmatprep.subr.bf16.mxu0 0
        %747 = vmatpush1.bf16.msra.mxu0 %v712
        %748 = vmatprep.subr.bf16.mxu0 0
        %749 = vmatpush1.bf16.msra.mxu0 %v711
        %750 = vmatprep.subr.bf16.mxu0 0
        %751 = vmatpush1.bf16.msra.mxu0 %v710
        %752 = vmatprep.subr.bf16.mxu0 0
        %753 = vmatpush1.bf16.msra.mxu0 %v709
        %754 = vmatprep.subr.bf16.mxu0 0
        %755 = vmatpush1.bf16.msra.mxu0 %v708
        %756 = vmatprep.subr.bf16.mxu0 0
        %757 = vmatpush2.bf16.msra.mxu0 %v723
        %758 = vmatprep.subr.bf16.mxu0 0
        %759 = vmatpush2.bf16.msra.mxu0 %v722
        %760 = vmatprep.subr.bf16.mxu0 0
        %761 = vmatpush2.bf16.msra.mxu0 %v721
        %762 = vmatprep.subr.bf16.mxu0 0
        %763 = vmatpush2.bf16.msra.mxu0 %v720
        %764 = vmatprep.subr.bf16.mxu0 0
        %765 = vmatpush2.bf16.msra.mxu0 %v719
        %766 = vmatprep.subr.bf16.mxu0 0
        %767 = vmatpush2.bf16.msra.mxu0 %v718
        %768 = vmatprep.subr.bf16.mxu0 0
        %769 = vmatpush2.bf16.msra.mxu0 %v717
        %770 = vmatprep.subr.bf16.mxu0 0
        %771 = vmatpush2.bf16.msra.mxu0 %v716
        %772 = vmatprep.mubr.bf16.mxu0 %v611
        %773 = vmatmul.mubr.bf16.gmra.mxu0 %v610
        %v774 = vpop.f32.mrf.mxu0
        %v775 = vadd.f32 0.0, %v774
        %v776 = vpop.f32.mrf.mxu0
        %v777 = vpop.f32.mrf.mxu0
        %v778 = vadd.f32 0.0, %v777
        %v779 = vpop.f32.mrf.mxu0
        %780 = vdwg.mxu0
        %p781 = scmp.eq.s32.totalorder %s25, 0
        // Predicated region
        $region45: #{mlp_pallas.1} parent=31 // pred_check
          %p782 = pneg %p781
        $region46: #{mlp_pallas.1} parent=31 // pred_check_branch
          %784 = sbr.rel (%p782) target = $region48
        $region47: #{mlp_pallas.1} parent=31 // pred_region
          %785 = vst [vmem:[#allocation2] sm:$0xff] %v775
          %786 = vst [vmem:[#allocation2 + $0x8] sm:$0xff] %v778
        $region48: #{mlp_pallas.1} parent=31 // pred_fallthru
          _
        %p787 = scmp.gt.s32.totalorder %s25, 0
        // Predicated region
        $region49: #{mlp_pallas.1} parent=31 // pred_check
          %p788 = pneg %p787
        $region50: #{mlp_pallas.1} parent=31 // pred_check_branch
          %790 = sbr.rel (%p788) target = $region52
        $region51: #{mlp_pallas.1} parent=31 // pred_region
          %v791 = vld [vmem:[#allocation2] sm:$0xff]
          %v792 = vld [vmem:[#allocation2 + $0x8] sm:$0xff]
          %v793 = vadd.f32 %v791, %v775
          %v794 = vadd.f32 %v792, %v778
          %795 = vst [vmem:[#allocation2] sm:$0xff] %v793
          %796 = vst [vmem:[#allocation2 + $0x8] sm:$0xff] %v794
        $region52: #{mlp_pallas.1} parent=31 // pred_fallthru
          _
        // Predicated region
        $region53: #{mlp_pallas.1} parent=31 // pred_check
          %p797 = pneg %p781
        $region54: #{mlp_pallas.1} parent=31 // pred_check_branch
          %799 = sbr.rel (%p797) target = $region56
        $region55: #{mlp_pallas.1} parent=31 // pred_region
          %v800 = vld [vmem:[#allocation2] sm:$0xff]
          %v801 = vld [vmem:[#allocation2 + $0x8] sm:$0xff]
          %802 = vst [vmem:[%s289] sm:$0xff] %v800
          %803 = vst [vmem:[%s289 + $0x8] sm:$0xff] %v801
        $region56: #{mlp_pallas.1} parent=31 // pred_fallthru
          _
        %s804 = smul.u32 2, %s24
        %p805 = scmp.lt.s32.totalorder %s23, 1
        %s806 = scalar_select %p805, %s23, 1
        %p807 = scmp.lt.s32.totalorder %s804, 1
        %s808 = scalar_select %p807, %s804, 1
        %s809 = smul.addr %s806, 2
        %s810 = sadd.s32 %s808, %s809
        %s811 = smul.addr %s810, 8
        %s812 = scalar_lea.vmem %s3, %s811
        // Predicated region
        $region57: #{mlp_pallas.1} parent=31 // pred_check
          %p813 = pneg %p139
        $region58: #{mlp_pallas.1} parent=31 // pred_check_branch
          %815 = sbr.rel (%p813) target = $region60
        $region59: #{mlp_pallas.1} parent=31 // pred_region
          %s816 = smul.u32 2, %s24
        $region60: #{mlp_pallas.1} parent=31 // pred_fallthru
          _
      $region32: #{mlp_pallas.1} parent=5 // pred_fallthru
        _
      %p817 = scmp.le.s32.totalorder 2, %s13
      // Predicated region
      $region61: #{mlp_pallas.1} parent=5 // pred_check
        %p818 = pneg %p817
      $region62: #{mlp_pallas.1} parent=5 // pred_check_branch
        %820 = sbr.rel (%p818) target = $region64
      $region63: #{mlp_pallas.1} parent=5 // pred_region
        %s821 = ssub.s32 %s13, 2
        // Predicated region
        $region65: #{mlp_pallas.1} parent=63 // pred_check
          %p822 = pneg %p145
        $region66: #{mlp_pallas.1} parent=63 // pred_check_branch
          %824 = sbr.rel (%p822) target = $region68
        $region67: #{mlp_pallas.1} parent=63 // pred_region
          %s825 = smul.u32 2, %s27
          %p826 = scmp.lt.s32.totalorder %s26, 1
          %s827 = scalar_select %p826, %s26, 1
          %p828 = scmp.lt.s32.totalorder %s825, 1
          %s829 = scalar_select %p828, %s825, 1
          %s830 = smul.addr %s827, 2
          %s831 = sadd.s32 %s829, %s830
          %s832 = smul.addr %s831, 8
          %s833 = scalar_lea.vmem %s3, %s832
        $region68: #{mlp_pallas.1} parent=63 // pred_fallthru
          _
      $region64: #{mlp_pallas.1} parent=5 // pred_fallthru
        _
    $region6: #{mlp_pallas.1} parent=1 // loop_footer
      %s17 = sadd.s32 1, %s13
    $region7: #{mlp_pallas.1} parent=1 // loop_footer_branch
      %12 = sbr.rel target = $region3
    $region8: #{mlp_pallas.1} parent=1 // loop_exit
      _
    %834 = vsyncpa [#allocation4], 1
    %s835 = scalar_lea.sflag [#allocation4], 1
    %836 = vsyncpa %s835, 1
    %837 = vsyncpa [#allocation6], 1
    %s838 = scalar_lea.sflag [#allocation6], 1
    %839 = vsyncpa %s838, 1

</llo_original>
